<compile_context>
chip_gen: v7x
topology: tpu7x:2x2x1
jax: 0.10.0
libtpu: 0.0.40
codegen_flags: <defaults>
</compile_context>

<pallas_src>
import functools
import math

import jax
import jax.numpy as jnp
from jax.experimental import pallas as pl
from jax.experimental.pallas import tpu as pltpu


def _round_up(a, b):
    return (a + b - 1) // b * b


def _adapter_kernel(x_ref, wf_ref, bf_ref, wu_ref, bu_ref, out_ref, loss_ref, *,
                    down_dim, gate_T, gate_base_scale, use_gate):
    x = x_ref[...]                               # (tm, D) native dtype -> MXU path
    xf = x.astype(jnp.float32)                   # f32 only for norm / |x| path

    # Fused down-proj + gate-similarity matmul: x @ [Wd^T | Ghat^T] + [bd | 0].
    fused = jnp.dot(x, wf_ref[...], preferred_element_type=jnp.float32) + bf_ref[...]

    # adapter_up(dropout(relu(adapter_down(x)))) -- dropout p=0 is identity.
    h = jnp.maximum(fused[:, :down_dim], 0.0)
    up = jnp.dot(h.astype(wu_ref.dtype), wu_ref[...],
                 preferred_element_type=jnp.float32) + bu_ref[...]

    if use_gate:
        # cosine-similarity gate: sigmoid(T * max_g cos(x, g)) * base_scale
        sumsq = jnp.sum(xf * xf, axis=-1, keepdims=True)
        inv_norm = jax.lax.rsqrt(sumsq + 1e-12)          # EUP rsqrt, eps-guarded
        sim = fused[:, down_dim:] * inv_norm             # gate columns of fused
        max_sim = jnp.max(sim, axis=-1, keepdims=True)
        scale = gate_base_scale * jax.nn.sigmoid(gate_T * max_sim)
    else:
        scale = gate_base_scale

    out_ref[...] = (up * scale).astype(out_ref.dtype)

    # self-KD L1: per-tile partial column sums of |x| (no cross-grid accumulator,
    # so the grid axis stays "parallel"); wrapper reduces and normalizes.
    loss_ref[...] = jnp.sum(jnp.abs(xf), axis=0, keepdims=True).reshape(1, 1, -1)


def adapter_forward(x, params, *, gate_T=2.0, gate_base_scale=0.5,
                    use_gate=True, use_self_kd=True, tile_m=512):
    B, N, D = x.shape
    M = B * N

    # Row tiling: big tiles by default, 8-sublane aligned, padded tail.
    tm = _round_up(min(tile_m, _round_up(M, 8)), 8)
    M_pad = _round_up(M, tm)
    num_tiles = M_pad // tm

    x2 = x.reshape(M, D)
    if M_pad != M:
        x2 = jnp.pad(x2, ((0, M_pad - M), (0, 0)))       # zero rows: loss += 0, sliced out

    wd_t = params["wd"].T.astype(x.dtype)                # (D, down_dim)
    wu_t = params["wu"].T.astype(x.dtype)                # (down_dim, out_dim)
    bd = params["bd"].reshape(1, -1).astype(jnp.float32)
    bu = params["bu"].reshape(1, -1).astype(jnp.float32)
    down_dim = wd_t.shape[1]
    out_dim = wu_t.shape[1]

    if use_gate:
        g = params["gate"]
        g_norm_t = (g / jnp.linalg.norm(g, axis=-1, keepdims=True)).T.astype(x.dtype)
        G = g_norm_t.shape[1]
        w_fused = jnp.concatenate([wd_t, g_norm_t], axis=1)          # (D, down+G)
        b_fused = jnp.concatenate([bd, jnp.zeros((1, G), jnp.float32)], axis=1)
    else:
        w_fused = wd_t
        b_fused = bd
    fcols = w_fused.shape[1]

    # Lane-dense output store: pad out_dim up to a multiple of 128 (no-op for
    # the realistic 256-dim config; padded columns are exactly zero).
    out_pad = _round_up(out_dim, 128)
    if out_pad != out_dim:
        wu_t = jnp.pad(wu_t, ((0, 0), (0, out_pad - out_dim)))
        bu = jnp.pad(bu, ((0, 0), (0, out_pad - out_dim)))

    # Explicit VMEM budget (double-buffered tiles + weights), capped for v7x's
    # 64 MiB physical VMEM.
    itemsize = x.dtype.itemsize
    est = (2 * tm * D * itemsize                 # x tile
           + 2 * tm * out_pad * itemsize         # out tile
           + 2 * (D * fcols + down_dim * out_pad) * itemsize
           + 2 * (fcols + out_pad) * 4           # biases
           + 2 * D * 4)                          # loss partials
    vmem_limit = int(min(max(2 * est, 32 * 1024 * 1024), 48 * 1024 * 1024))

    kernel = functools.partial(_adapter_kernel, down_dim=down_dim, gate_T=gate_T,
                               gate_base_scale=gate_base_scale, use_gate=use_gate)

    out2, loss_parts = pl.pallas_call(
        kernel,
        out_shape=(jax.ShapeDtypeStruct((M_pad, out_pad), x.dtype),
                   jax.ShapeDtypeStruct((num_tiles, 1, D), jnp.float32)),
        grid_spec=pltpu.PrefetchScalarGridSpec(
            num_scalar_prefetch=0,
            grid=(num_tiles,),
            in_specs=[
                pl.BlockSpec((tm, D), lambda i: (i, 0)),           # x tile
                pl.BlockSpec((D, fcols), lambda i: (0, 0)),        # [Wd^T | Ghat^T]
                pl.BlockSpec((1, fcols), lambda i: (0, 0)),        # [bd | 0]
                pl.BlockSpec((down_dim, out_pad), lambda i: (0, 0)),  # Wu^T (padded)
                pl.BlockSpec((1, out_pad), lambda i: (0, 0)),      # bu (padded)
            ],
            out_specs=[
                pl.BlockSpec((tm, out_pad), lambda i: (i, 0)),
                pl.BlockSpec((1, 1, D), lambda i: (i, 0, 0)),      # per-tile |x| partials
            ],
        ),
        compiler_params=pltpu.CompilerParams(
            dimension_semantics=("parallel",),                     # no revisited output
            vmem_limit_bytes=vmem_limit),
    )(x2, w_fused, b_fused, wu_t, bu)

    adapter_out = out2[:M, :out_dim].reshape(B, N, out_dim)
    moe_loss = jnp.zeros((1,), dtype=x.dtype)
    if use_self_kd:
        moe_loss = moe_loss + (jnp.sum(loss_parts) / (M * D)).astype(x.dtype)
    return adapter_out, moe_loss


def adapter_reference(x, params, *, gate_T=2.0, gate_base_scale=0.5, use_gate=True):
    """Pure-JAX reference mirroring the forward."""
    B, N, D = x.shape
    h = jnp.maximum(x @ params["wd"].T + params["bd"], 0.0)
    up = h @ params["wu"].T + params["bu"]
    if use_gate:
        xn = x / jnp.linalg.norm(x, axis=-1, keepdims=True)
        gn = params["gate"] / jnp.linalg.norm(params["gate"], axis=-1, keepdims=True)
        sim = (xn.reshape(B * N, D) @ gn.T).max(axis=-1).reshape(B, N)
        scale = gate_base_scale * jax.nn.sigmoid(gate_T * sim)[..., None]
    else:
        scale = gate_base_scale
    loss = jnp.mean(jnp.abs(x))
    return up * scale, jnp.zeros((1,), x.dtype) + loss


if __name__ == "__main__":
    # Small shapes consistent with the module's (B, N, embed_dim) input.
    B, N = 2, 72
    embed_dim, down_dim, output_dim, num_gate = 32, 16, 32, 5

    key = jax.random.PRNGKey(0)
    kx, kd, ku, kg = jax.random.split(key, 4)

    # kaiming_uniform_(a=sqrt(5)) -> U(-1/sqrt(fan_in), 1/sqrt(fan_in))
    bound = 1.0 / math.sqrt(embed_dim)
    wd = jax.random.uniform(kd, (down_dim, embed_dim), jnp.float32, -bound, bound)
    # NOTE: module zero-inits the up-projection (=> identically zero output); use
    # small nonzero values so the kernel path is actually exercised.
    wu = jax.random.uniform(ku, (output_dim, down_dim), jnp.float32, -0.05, 0.05)
    params = {
        "wd": wd,
        "bd": jnp.zeros((down_dim,), jnp.float32),
        "wu": wu,
        "bu": jnp.zeros((output_dim,), jnp.float32),
        "gate": jax.random.normal(kg, (num_gate, embed_dim), jnp.float32),
    }
    x = jax.random.normal(kx, (B, N, embed_dim), jnp.float32)

    ref_out, ref_loss = adapter_reference(x, params)

    # (a) default big-tile config (single tile at these demo sizes).
    out, moe_loss = adapter_forward(x, params)
    out = jax.block_until_ready(out)
    moe_loss = jax.block_until_ready(moe_loss)
    assert out.shape == (B, N, output_dim)
    assert moe_loss.shape == (1,)
    assert jnp.allclose(out, ref_out, atol=1e-5, rtol=1e-5)
    assert jnp.allclose(moe_loss, ref_loss, atol=1e-5, rtol=1e-5)

    # (b) small tile_m only to exercise the multi-tile parallel grid + padded
    #     tail + per-tile loss partials at these tiny demo shapes.
    out_b, loss_b = adapter_forward(x, params, tile_m=64)
    out_b = jax.block_until_ready(out_b)
    assert jnp.allclose(out_b, ref_out, atol=1e-5, rtol=1e-5)
    assert jnp.allclose(loss_b, ref_loss, atol=1e-5, rtol=1e-5)

    # (c) use_gate=False path: constant base scale only.
    out_c, _ = adapter_forward(x, params, use_gate=False)
    ref_c, _ = adapter_reference(x, params, use_gate=False)
    assert jnp.allclose(jax.block_until_ready(out_c), ref_c, atol=1e-5, rtol=1e-5)

    print("KERNEL_OK")
</pallas_src>

<mosaic_0001>
module attributes {stable_mosaic.version = 11 : i64} {
  func.func @_adapter_kernel(%arg0: i32, %arg1: memref<144x32xf32, #tpu.memory_space<vmem>>, %arg2: memref<32x21xf32, #tpu.memory_space<vmem>>, %arg3: memref<1x21xf32, #tpu.memory_space<vmem>>, %arg4: memref<16x128xf32, #tpu.memory_space<vmem>>, %arg5: memref<1x128xf32, #tpu.memory_space<vmem>>, %arg6: memref<144x128xf32, #tpu.memory_space<vmem>>, %arg7: memref<1x1x32xf32, #tpu.memory_space<vmem>>) attributes {dimension_semantics = [#tpu.dimension_semantics<parallel>], iteration_bounds = array<i64: 1>, scalar_prefetch = 0 : i64, scratch_operands = 0 : i64, tpu.core_type = #tpu.core_type<tc>, window_params = [{transform_indices = @transform_0, window_bounds = array<i64: 144, 32>}, {pipeline_mode = #tpu.pipeline_mode<synchronous>, transform_indices = @transform_1, window_bounds = array<i64: 32, 21>}, {pipeline_mode = #tpu.pipeline_mode<synchronous>, transform_indices = @transform_2, window_bounds = array<i64: 1, 21>}, {pipeline_mode = #tpu.pipeline_mode<synchronous>, transform_indices = @transform_3, window_bounds = array<i64: 16, 128>}, {pipeline_mode = #tpu.pipeline_mode<synchronous>, transform_indices = @transform_4, window_bounds = array<i64: 1, 128>}, {transform_indices = @transform_5, window_bounds = array<i64: 144, 128>}, {transform_indices = @transform_6, window_bounds = array<i64: 1, 1, 32>}]} {
    %c0 = arith.constant 0 : index
    %c0_0 = arith.constant 0 : index
    %0 = vector.load %arg1[%c0, %c0_0] : memref<144x32xf32, #tpu.memory_space<vmem>>, vector<144x32xf32>
    %c0_1 = arith.constant 0 : index
    %c0_2 = arith.constant 0 : index
    %1 = vector.load %arg2[%c0_1, %c0_2] : memref<32x21xf32, #tpu.memory_space<vmem>>, vector<32x21xf32>
    %cst = arith.constant dense<0.000000e+00> : vector<144x21xf32>
    %2 = tpu.matmul %0, %1, %cst {dimension_numbers = #tpu.dot_dimension_numbers<[1], [0], [0], [1], [0, 0, 1, 1], [], []>} : vector<144x32xf32>, vector<32x21xf32>, vector<144x21xf32> -> vector<144x21xf32>
    %c0_3 = arith.constant 0 : index
    %c0_4 = arith.constant 0 : index
    %3 = vector.load %arg3[%c0_3, %c0_4] : memref<1x21xf32, #tpu.memory_space<vmem>>, vector<1x21xf32>
    %4 = vector.broadcast %3 : vector<1x21xf32> to vector<144x21xf32>
    %5 = arith.addf %2, %4 : vector<144x21xf32>
    %6 = vector.extract_strided_slice %5 {offsets = [0, 0], sizes = [144, 16], strides = [1, 1]} : vector<144x21xf32> to vector<144x16xf32>
    %cst_5 = arith.constant 0.000000e+00 : f32
    %7 = vector.broadcast %cst_5 : f32 to vector<144x16xf32>
    %8 = arith.maximumf %6, %7 : vector<144x16xf32>
    %c0_6 = arith.constant 0 : index
    %c0_7 = arith.constant 0 : index
    %9 = vector.load %arg4[%c0_6, %c0_7] : memref<16x128xf32, #tpu.memory_space<vmem>>, vector<16x128xf32>
    %cst_8 = arith.constant dense<0.000000e+00> : vector<144x128xf32>
    %10 = tpu.matmul %8, %9, %cst_8 {dimension_numbers = #tpu.dot_dimension_numbers<[1], [0], [0], [1], [0, 0, 1, 1], [], []>} : vector<144x16xf32>, vector<16x128xf32>, vector<144x128xf32> -> vector<144x128xf32>
    %c0_9 = arith.constant 0 : index
    %c0_10 = arith.constant 0 : index
    %11 = vector.load %arg5[%c0_9, %c0_10] : memref<1x128xf32, #tpu.memory_space<vmem>>, vector<1x128xf32>
    %12 = vector.broadcast %11 : vector<1x128xf32> to vector<144x128xf32>
    %13 = arith.addf %10, %12 : vector<144x128xf32>
    %14 = arith.mulf %0, %0 : vector<144x32xf32>
    %cst_11 = arith.constant dense<0.000000e+00> : vector<144xf32>
    %15 = vector.multi_reduction <add>, %14, %cst_11 [1] : vector<144x32xf32> to vector<144xf32>
    %16 = vector.shape_cast %15 : vector<144xf32> to vector<144x1xf32>
    %cst_12 = arith.constant 9.99999996E-13 : f32
    %17 = vector.broadcast %cst_12 : f32 to vector<144x1xf32>
    %18 = arith.addf %16, %17 : vector<144x1xf32>
    %19 = math.rsqrt %18 : vector<144x1xf32>
    %20 = vector.extract_strided_slice %5 {offsets = [0, 16], sizes = [144, 5], strides = [1, 1]} : vector<144x21xf32> to vector<144x5xf32>
    %21 = vector.broadcast %19 : vector<144x1xf32> to vector<144x5xf32>
    %22 = arith.mulf %20, %21 : vector<144x5xf32>
    %cst_13 = arith.constant dense<0xFF800000> : vector<144xf32>
    %23 = vector.multi_reduction <maximumf>, %22, %cst_13 [1] : vector<144x5xf32> to vector<144xf32>
    %24 = vector.shape_cast %23 : vector<144xf32> to vector<144x1xf32>
    %cst_14 = arith.constant 2.000000e+00 : f32
    %25 = vector.broadcast %cst_14 : f32 to vector<144x1xf32>
    %26 = arith.mulf %25, %24 : vector<144x1xf32>
    %27 = arith.negf %26 : vector<144x1xf32>
    %28 = math.exp %27 : vector<144x1xf32>
    %cst_15 = arith.constant 1.000000e+00 : f32
    %29 = vector.broadcast %cst_15 : f32 to vector<144x1xf32>
    %30 = arith.addf %29, %28 : vector<144x1xf32>
    %31 = arith.divf %29, %30 : vector<144x1xf32>
    %cst_16 = arith.constant 5.000000e-01 : f32
    %32 = vector.broadcast %cst_16 : f32 to vector<144x1xf32>
    %33 = arith.mulf %32, %31 : vector<144x1xf32>
    %34 = vector.broadcast %33 : vector<144x1xf32> to vector<144x128xf32>
    %35 = arith.mulf %13, %34 : vector<144x128xf32>
    %c0_17 = arith.constant 0 : index
    %c0_18 = arith.constant 0 : index
    %36 = vector.load %arg6[%c0_17, %c0_18] : memref<144x128xf32, #tpu.memory_space<vmem>>, vector<144x128xf32>
    tpu.vector_store %arg6[%c0_17, %c0_18], %35 {strides = array<i32>} : memref<144x128xf32, #tpu.memory_space<vmem>>, vector<144x128xf32>,
    %37 = math.absf %0 : vector<144x32xf32>
    %cst_19 = arith.constant dense<0.000000e+00> : vector<32xf32>
    %38 = vector.multi_reduction <add>, %37, %cst_19 [0] : vector<144x32xf32> to vector<32xf32>
    %39 = vector.shape_cast %38 : vector<32xf32> to vector<1x32xf32>
    %40 = vector.shape_cast %39 : vector<1x32xf32> to vector<1x1x32xf32>
    %c0_20 = arith.constant 0 : index
    %c0_21 = arith.constant 0 : index
    %c0_22 = arith.constant 0 : index
    %41 = vector.load %arg7[%c0_20, %c0_21, %c0_22] : memref<1x1x32xf32, #tpu.memory_space<vmem>>, vector<1x1x32xf32>
    tpu.vector_store %arg7[%c0_20, %c0_21, %c0_22], %40 {strides = array<i32>} : memref<1x1x32xf32, #tpu.memory_space<vmem>>, vector<1x1x32xf32>,
    return
  }
  func.func @transform_0(%arg0: i32) -> (i32, i32) {
    %c0_i32 = arith.constant 0 : i32
    %c0_i32_0 = arith.constant 0 : i32
    return %arg0, %c0_i32 : i32, i32
  }
  func.func @transform_1(%arg0: i32) -> (i32, i32) {
    %c0_i32 = arith.constant 0 : i32
    %c0_i32_0 = arith.constant 0 : i32
    %c0_i32_1 = arith.constant 0 : i32
    return %c0_i32, %c0_i32_0 : i32, i32
  }
  func.func @transform_2(%arg0: i32) -> (i32, i32) {
    %c0_i32 = arith.constant 0 : i32
    %c0_i32_0 = arith.constant 0 : i32
    %c0_i32_1 = arith.constant 0 : i32
    return %c0_i32, %c0_i32_0 : i32, i32
  }
  func.func @transform_3(%arg0: i32) -> (i32, i32) {
    %c0_i32 = arith.constant 0 : i32
    %c0_i32_0 = arith.constant 0 : i32
    %c0_i32_1 = arith.constant 0 : i32
    return %c0_i32, %c0_i32_0 : i32, i32
  }
  func.func @transform_4(%arg0: i32) -> (i32, i32) {
    %c0_i32 = arith.constant 0 : i32
    %c0_i32_0 = arith.constant 0 : i32
    %c0_i32_1 = arith.constant 0 : i32
    return %c0_i32, %c0_i32_0 : i32, i32
  }
  func.func @transform_5(%arg0: i32) -> (i32, i32) {
    %c0_i32 = arith.constant 0 : i32
    %c0_i32_0 = arith.constant 0 : i32
    return %arg0, %c0_i32 : i32, i32
  }
  func.func @transform_6(%arg0: i32) -> (i32, i32, i32) {
    %c0_i32 = arith.constant 0 : i32
    %c0_i32_0 = arith.constant 0 : i32
    %c0_i32_1 = arith.constant 0 : i32
    return %arg0, %c0_i32, %c0_i32_0 : i32, i32, i32
  }
}

</mosaic_0001>

<llo_original>
// kernel: tpu_custom_call.1
$region0: #{tpu_custom_call.1}
  #allocation0 [shape = 'u32[]', space=smem, size = 0x4, offset = 0x4, fixed_abs, tag = 'smem constant byte address 0x4 - core index']
  #allocation1 [shape = 'u32[144,128]{1,0:T(1,128)}', space=vmem, size = 0x12000, scoped, tag = 'internal scratch']
  %s0 = inlined_call_operand.vmem [shape: f32[144,32], index: 0, kind: input, shape index: {}]
  %s1 = inlined_call_operand.vmem [shape: f32[32,21], index: 1, kind: input, shape index: {}]
  %s2 = inlined_call_operand.vmem [shape: f32[1,21], index: 2, kind: input, shape index: {}]
  %s3 = inlined_call_operand.vmem [shape: f32[16,128], index: 3, kind: input, shape index: {}]
  %s4 = inlined_call_operand.vmem [shape: f32[1,128], index: 4, kind: input, shape index: {}]
  %s5 = inlined_call_operand.hbm [shape: f32[144,128], index: 5, kind: output, shape index: {0}]
  %s6 = inlined_call_operand.hbm [shape: f32[1,1,32], index: 6, kind: output, shape index: {1}]
  %7 = xla_tuple %s5, %s6
  %s8 = sld [smem:[#allocation0]]
  $region38: #{tpu_custom_call.1} parent=0
    _
  %s10 = ssub.s32 1, %s8
  %s11 = scalar_select 0, %s10, %s8
  $region1: #{tpu_custom_call.1} parent=0
    #allocation2 [shape = 'u8[73728]{0}', space=vmem, size = 0x12000, scoped, tag = 'output window, operand 0, single buffered']
    #allocation3 [shape = 's32[1]{0}', space=sflag, size = 0x4, scoped, tag = 'scoped memory for tpu_custom_call.1']
    #allocation4 [shape = 'u8[512]{0}', space=vmem, size = 0x400, scoped, tag = 'output window, operand 1, single buffered']
    #allocation5 [shape = 's32[1]{0}', space=sflag, size = 0x4, scoped, tag = 'scoped memory for tpu_custom_call.1']
    %12 = vsyncpa [#allocation3], 0
    %13 = vsyncpa [#allocation5], 0
    // Predicated region
    $region2: #{tpu_custom_call.1} parent=1 // pred_check
      _
    $region3: #{tpu_custom_call.1} parent=1 // pred_check_branch
      %15 = sbr.rel (0) target = $region5
    $region4: #{tpu_custom_call.1} parent=1 // pred_region
      _
    $region5: #{tpu_custom_call.1} parent=1 // pred_fallthru
      _
    // Predicated region
    $region6: #{tpu_custom_call.1} parent=1 // pred_check
      _
    $region7: #{tpu_custom_call.1} parent=1 // pred_check_branch
      %17 = sbr.rel (0) target = $region9
    $region8: #{tpu_custom_call.1} parent=1 // pred_region
      _
    $region9: #{tpu_custom_call.1} parent=1 // pred_fallthru
      _
    // Predicated region
    $region10: #{tpu_custom_call.1} parent=1 // pred_check
      _
    $region11: #{tpu_custom_call.1} parent=1 // pred_check_branch
      %19 = sbr.rel (0) target = $region13
    $region12: #{tpu_custom_call.1} parent=1 // pred_region
      _
    $region13: #{tpu_custom_call.1} parent=1 // pred_fallthru
      _
    // Predicated region
    $region14: #{tpu_custom_call.1} parent=1 // pred_check
      _
    $region15: #{tpu_custom_call.1} parent=1 // pred_check_branch
      %21 = sbr.rel (0) target = $region17
    $region16: #{tpu_custom_call.1} parent=1 // pred_region
      _
    $region17: #{tpu_custom_call.1} parent=1 // pred_fallthru
      _
    // Predicated region
    $region18: #{tpu_custom_call.1} parent=1 // pred_check
      _
    $region19: #{tpu_custom_call.1} parent=1 // pred_check_branch
      %23 = sbr.rel (0) target = $region21
    $region20: #{tpu_custom_call.1} parent=1 // pred_region
      _
    $region21: #{tpu_custom_call.1} parent=1 // pred_fallthru
      _
    %v24 = vld [vmem:[%s0] sm:$0xff]
    %v25 = vld [vmem:[%s0 + $0x8] sm:$0xff]
    %v26 = vld [vmem:[%s0 + $0x10] sm:$0xff]
    %v27 = vld [vmem:[%s0 + $0x18] sm:$0xff]
    %v28 = vld [vmem:[%s0 + $0x20] sm:$0xff]
    %v29 = vld [vmem:[%s0 + $0x28] sm:$0xff]
    %v30 = vld [vmem:[%s0 + $0x30] sm:$0xff]
    %v31 = vld [vmem:[%s0 + $0x38] sm:$0xff]
    %v32 = vld [vmem:[%s0 + $0x40] sm:$0xff]
    %v33 = vld [vmem:[%s0 + $0x48] sm:$0xff]
    %v34 = vld [vmem:[%s0 + $0x50] sm:$0xff]
    %v35 = vld [vmem:[%s0 + $0x58] sm:$0xff]
    %v36 = vld [vmem:[%s0 + $0x60] sm:$0xff]
    %v37 = vld [vmem:[%s0 + $0x68] sm:$0xff]
    %v38 = vld [vmem:[%s0 + $0x70] sm:$0xff]
    %v39 = vld [vmem:[%s0 + $0x78] sm:$0xff]
    %v40 = vld [vmem:[%s0 + $0x80] sm:$0xff]
    %v41 = vld [vmem:[%s0 + $0x88] sm:$0xff]
    %v42 = vld [vmem:[%s1] sm:$0xff]
    %v43 = vld [vmem:[%s1 + $0x8] sm:$0xff]
    %v44 = vld [vmem:[%s1 + $0x10] sm:$0xff]
    %v45 = vld [vmem:[%s1 + $0x18] sm:$0xff]
    %v46 = vld [vmem:[%s2] sm:$0x1]
    %v48 = vlaneseq
    %v49 = vshrl.u32 %v48, 7
    %v50 = vsub.s32 0, %v49
    %v51 = vrot.slane %v46, %v50
    %vm53 = vcmask 261120
    %v55 = vsel %vm53, %v24, 0
    %v58 = vsel %vm53, %v25, 0
    %v61 = vsel %vm53, %v26, 0
    %v64 = vsel %vm53, %v27, 0
    %v67 = vsel %vm53, %v28, 0
    %v70 = vsel %vm53, %v29, 0
    %v73 = vsel %vm53, %v30, 0
    %v76 = vsel %vm53, %v31, 0
    %v79 = vsel %vm53, %v32, 0
    %v82 = vsel %vm53, %v33, 0
    %v85 = vsel %vm53, %v34, 0
    %v88 = vsel %vm53, %v35, 0
    %v91 = vsel %vm53, %v36, 0
    %v94 = vsel %vm53, %v37, 0
    %v97 = vsel %vm53, %v38, 0
    %v100 = vsel %vm53, %v39, 0
    %v103 = vsel %vm53, %v40, 0
    %v106 = vsel %vm53, %v41, 0
    %108 = vmatprep.subr.mxu0 0.0
    %109 = vmatpush1.msra.mxu0 %v42
    %110 = vmatprep.subr.mxu0 0.0
    %111 = vmatpush1.msra.mxu0 %v43
    %112 = vmatprep.subr.mxu0 0.0
    %113 = vmatpush1.msra.mxu0 %v44
    %114 = vmatprep.subr.mxu0 0.0
    %115 = vmatpush1.msra.mxu0 %v45
    %116 = vmatprep.subr.mxu0 0.0
    %117 = vmatpush1.msra.mxu0 0.0
    %118 = vmatprep.subr.mxu0 0.0
    %119 = vmatpush1.msra.mxu0 0.0
    %120 = vmatprep.subr.mxu0 0.0
    %121 = vmatpush1.msra.mxu0 0.0
    %122 = vmatprep.subr.mxu0 0.0
    %123 = vmatpush1.msra.mxu0 0.0
    %124 = vmatprep.subr.mxu0 0.0
    %125 = vmatpush1.msra.mxu0 0.0
    %126 = vmatprep.subr.mxu0 0.0
    %127 = vmatpush1.msra.mxu0 0.0
    %128 = vmatprep.subr.mxu0 0.0
    %129 = vmatpush1.msra.mxu0 0.0
    %130 = vmatprep.subr.mxu0 0.0
    %131 = vmatpush1.msra.mxu0 0.0
    %132 = vmatprep.subr.mxu0 0.0
    %133 = vmatpush1.msra.mxu0 0.0
    %134 = vmatprep.subr.mxu0 0.0
    %135 = vmatpush1.msra.mxu0 0.0
    %136 = vmatprep.subr.mxu0 0.0
    %137 = vmatpush1.msra.mxu0 0.0
    %138 = vmatprep.subr.mxu0 0.0
    %139 = vmatpush1.msra.mxu0 0.0
    %140 = vmatprep.subr.mxu0 0.0
    %141 = vmatpush1.msra.mxu0 0.0
    %142 = vmatprep.subr.mxu0 0.0
    %143 = vmatpush1.msra.mxu0 0.0
    %144 = vmatprep.subr.mxu0 0.0
    %145 = vmatpush1.msra.mxu0 0.0
    %146 = vmatprep.subr.mxu0 0.0
    %147 = vmatpush1.msra.mxu0 0.0
    %148 = vmatprep.subr.mxu0 0.0
    %149 = vmatpush1.msra.mxu0 0.0
    %150 = vmatprep.subr.mxu0 0.0
    %151 = vmatpush1.msra.mxu0 0.0
    %152 = vmatprep.subr.mxu0 0.0
    %153 = vmatpush1.msra.mxu0 0.0
    %154 = vmatprep.subr.mxu0 0.0
    %155 = vmatpush1.msra.mxu0 0.0
    %156 = vmatprep.subr.mxu0 0.0
    %157 = vmatpush1.msra.mxu0 0.0
    %158 = vmatprep.subr.mxu0 0.0
    %159 = vmatpush1.msra.mxu0 0.0
    %160 = vmatprep.subr.mxu0 0.0
    %161 = vmatpush1.msra.mxu0 0.0
    %162 = vmatprep.subr.mxu0 0.0
    %163 = vmatpush1.msra.mxu0 0.0
    %164 = vmatprep.subr.mxu0 0.0
    %165 = vmatpush1.msra.mxu0 0.0
    %166 = vmatprep.subr.mxu0 0.0
    %167 = vmatpush1.msra.mxu0 0.0
    %168 = vmatprep.subr.mxu0 0.0
    %169 = vmatpush1.msra.mxu0 0.0
    %170 = vmatprep.subr.mxu0 0.0
    %171 = vmatpush1.msra.mxu0 0.0
    %172 = vmatprep.mubr.f32.mxu0 0.0
    %173 = vmatmul.mubr.f32.gmra.mrb[0].mxu0 %v55
    %v174 = vpop.f32.mrb[0].mxu0
    %v175 = vadd.f32 %v51, %v174
    %v176 = vpop.f32.mrb[0].mxu0
    %177 = vmatprep.mubr.f32.mxu0 0.0
    %178 = vmatmul.mubr.f32.gmra.mrb[0].mxu0 %v58
    %v179 = vpop.f32.mrb[0].mxu0
    %v180 = vadd.f32 %v51, %v179
    %v181 = vpop.f32.mrb[0].mxu0
    %182 = vmatprep.mubr.f32.mxu0 0.0
    %183 = vmatmul.mubr.f32.gmra.mrb[0].mxu0 %v61
    %v184 = vpop.f32.mrb[0].mxu0
    %v185 = vadd.f32 %v51, %v184
    %v186 = vpop.f32.mrb[0].mxu0
    %187 = vmatprep.mubr.f32.mxu0 0.0
    %188 = vmatmul.mubr.f32.gmra.mrb[0].mxu0 %v64
    %v189 = vpop.f32.mrb[0].mxu0
    %v190 = vadd.f32 %v51, %v189
    %v191 = vpop.f32.mrb[0].mxu0
    %192 = vmatprep.mubr.f32.mxu0 0.0
    %193 = vmatmul.mubr.f32.gmra.mrb[0].mxu0 %v67
    %v194 = vpop.f32.mrb[0].mxu0
    %v195 = vadd.f32 %v51, %v194
    %v196 = vpop.f32.mrb[0].mxu0
    %197 = vmatprep.mubr.f32.mxu0 0.0
    %198 = vmatmul.mubr.f32.gmra.mrb[0].mxu0 %v70
    %v199 = vpop.f32.mrb[0].mxu0
    %v200 = vadd.f32 %v51, %v199
    %v201 = vpop.f32.mrb[0].mxu0
    %202 = vmatprep.mubr.f32.mxu0 0.0
    %203 = vmatmul.mubr.f32.gmra.mrb[0].mxu0 %v73
    %v204 = vpop.f32.mrb[0].mxu0
    %v205 = vadd.f32 %v51, %v204
    %v206 = vpop.f32.mrb[0].mxu0
    %207 = vmatprep.mubr.f32.mxu0 0.0
    %208 = vmatmul.mubr.f32.gmra.mrb[0].mxu0 %v76
    %v209 = vpop.f32.mrb[0].mxu0
    %v210 = vadd.f32 %v51, %v209
    %v211 = vpop.f32.mrb[0].mxu0
    %212 = vmatprep.mubr.f32.mxu0 0.0
    %213 = vmatmul.mubr.f32.gmra.mrb[0].mxu0 %v79
    %v214 = vpop.f32.mrb[0].mxu0
    %v215 = vadd.f32 %v51, %v214
    %v216 = vpop.f32.mrb[0].mxu0
    %217 = vmatprep.mubr.f32.mxu0 0.0
    %218 = vmatmul.mubr.f32.gmra.mrb[0].mxu0 %v82
    %v219 = vpop.f32.mrb[0].mxu0
    %v220 = vadd.f32 %v51, %v219
    %v221 = vpop.f32.mrb[0].mxu0
    %222 = vmatprep.mubr.f32.mxu0 0.0
    %223 = vmatmul.mubr.f32.gmra.mrb[0].mxu0 %v85
    %v224 = vpop.f32.mrb[0].mxu0
    %v225 = vadd.f32 %v51, %v224
    %v226 = vpop.f32.mrb[0].mxu0
    %227 = vmatprep.mubr.f32.mxu0 0.0
    %228 = vmatmul.mubr.f32.gmra.mrb[0].mxu0 %v88
    %v229 = vpop.f32.mrb[0].mxu0
    %v230 = vadd.f32 %v51, %v229
    %v231 = vpop.f32.mrb[0].mxu0
    %232 = vmatprep.mubr.f32.mxu0 0.0
    %233 = vmatmul.mubr.f32.gmra.mrb[0].mxu0 %v91
    %v234 = vpop.f32.mrb[0].mxu0
    %v235 = vadd.f32 %v51, %v234
    %v236 = vpop.f32.mrb[0].mxu0
    %237 = vmatprep.mubr.f32.mxu0 0.0
    %238 = vmatmul.mubr.f32.gmra.mrb[0].mxu0 %v94
    %v239 = vpop.f32.mrb[0].mxu0
    %v240 = vadd.f32 %v51, %v239
    %v241 = vpop.f32.mrb[0].mxu0
    %242 = vmatprep.mubr.f32.mxu0 0.0
    %243 = vmatmul.mubr.f32.gmra.mrb[0].mxu0 %v97
    %v244 = vpop.f32.mrb[0].mxu0
    %v245 = vadd.f32 %v51, %v244
    %v246 = vpop.f32.mrb[0].mxu0
    %247 = vmatprep.mubr.f32.mxu0 0.0
    %248 = vmatmul.mubr.f32.gmra.mrb[0].mxu0 %v100
    %v249 = vpop.f32.mrb[0].mxu0
    %v250 = vadd.f32 %v51, %v249
    %v251 = vpop.f32.mrb[0].mxu0
    %252 = vmatprep.mubr.f32.mxu0 0.0
    %253 = vmatmul.mubr.f32.gmra.mrb[0].mxu0 %v103
    %v254 = vpop.f32.mrb[0].mxu0
    %v255 = vadd.f32 %v51, %v254
    %v256 = vpop.f32.mrb[0].mxu0
    %257 = vmatprep.mubr.f32.mxu0 0.0
    %258 = vmatmul.mubr.f32.gmra.mrb[0].mxu0 %v106
    %v259 = vpop.f32.mrb[0].mxu0
    %v260 = vadd.f32 %v51, %v259
    %v261 = vpop.f32.mrb[0].mxu0
    %262 = vdwg.mxu0
    %v263 = vmax.f32 %v175, 0.0
    %v264 = vmax.f32 %v180, 0.0
    %v265 = vmax.f32 %v185, 0.0
    %v266 = vmax.f32 %v190, 0.0
    %v267 = vmax.f32 %v195, 0.0
    %v268 = vmax.f32 %v200, 0.0
    %v269 = vmax.f32 %v205, 0.0
    %v270 = vmax.f32 %v210, 0.0
    %v271 = vmax.f32 %v215, 0.0
    %v272 = vmax.f32 %v220, 0.0
    %v273 = vmax.f32 %v225, 0.0
    %v274 = vmax.f32 %v230, 0.0
    %v275 = vmax.f32 %v235, 0.0
    %v276 = vmax.f32 %v240, 0.0
    %v277 = vmax.f32 %v245, 0.0
    %v278 = vmax.f32 %v250, 0.0
    %v279 = vmax.f32 %v255, 0.0
    %v280 = vmax.f32 %v260, 0.0
    %v281 = vld [vmem:[%s3] sm:$0xff]
    %v282 = vld [vmem:[%s3 + $0x8] sm:$0xff]
    %v283 = vld [vmem:[%s4] sm:$0x1]
    %v285 = vlaneseq
    %v286 = vshrl.u32 %v285, 7
    %v287 = vsub.s32 0, %v286
    %v288 = vrot.slane %v283, %v287
    %vm290 = vcmask 130048
    %v292 = vsel %vm290, %v263, 0
    %v295 = vsel %vm290, %v264, 0
    %v298 = vsel %vm290, %v265, 0
    %v301 = vsel %vm290, %v266, 0
    %v304 = vsel %vm290, %v267, 0
    %v307 = vsel %vm290, %v268, 0
    %v310 = vsel %vm290, %v269, 0
    %v313 = vsel %vm290, %v270, 0
    %v316 = vsel %vm290, %v271, 0
    %v319 = vsel %vm290, %v272, 0
    %v322 = vsel %vm290, %v273, 0
    %v325 = vsel %vm290, %v274, 0
    %v328 = vsel %vm290, %v275, 0
    %v331 = vsel %vm290, %v276, 0
    %v334 = vsel %vm290, %v277, 0
    %v337 = vsel %vm290, %v278, 0
    %v340 = vsel %vm290, %v279, 0
    %v343 = vsel %vm290, %v280, 0
    %345 = vmatprep.subr.mxu0 0.0
    %346 = vmatpush1.msra.mxu0 %v281
    %347 = vmatprep.subr.mxu0 0.0
    %348 = vmatpush1.msra.mxu0 %v282
    %349 = vmatprep.subr.mxu0 0.0
    %350 = vmatpush1.msra.mxu0 0.0
    %351 = vmatprep.subr.mxu0 0.0
    %352 = vmatpush1.msra.mxu0 0.0
    %353 = vmatprep.subr.mxu0 0.0
    %354 = vmatpush1.msra.mxu0 0.0
    %355 = vmatprep.subr.mxu0 0.0
    %356 = vmatpush1.msra.mxu0 0.0
    %357 = vmatprep.subr.mxu0 0.0
    %358 = vmatpush1.msra.mxu0 0.0
    %359 = vmatprep.subr.mxu0 0.0
    %360 = vmatpush1.msra.mxu0 0.0
    %361 = vmatprep.subr.mxu0 0.0
    %362 = vmatpush1.msra.mxu0 0.0
    %363 = vmatprep.subr.mxu0 0.0
    %364 = vmatpush1.msra.mxu0 0.0
    %365 = vmatprep.subr.mxu0 0.0
    %366 = vmatpush1.msra.mxu0 0.0
    %367 = vmatprep.subr.mxu0 0.0
    %368 = vmatpush1.msra.mxu0 0.0
    %369 = vmatprep.subr.mxu0 0.0
    %370 = vmatpush1.msra.mxu0 0.0
    %371 = vmatprep.subr.mxu0 0.0
    %372 = vmatpush1.msra.mxu0 0.0
    %373 = vmatprep.subr.mxu0 0.0
    %374 = vmatpush1.msra.mxu0 0.0
    %375 = vmatprep.subr.mxu0 0.0
    %376 = vmatpush1.msra.mxu0 0.0
    %377 = vmatprep.subr.mxu0 0.0
    %378 = vmatpush1.msra.mxu0 0.0
    %379 = vmatprep.subr.mxu0 0.0
    %380 = vmatpush1.msra.mxu0 0.0
    %381 = vmatprep.subr.mxu0 0.0
    %382 = vmatpush1.msra.mxu0 0.0
    %383 = vmatprep.subr.mxu0 0.0
    %384 = vmatpush1.msra.mxu0 0.0
    %385 = vmatprep.subr.mxu0 0.0
    %386 = vmatpush1.msra.mxu0 0.0
    %387 = vmatprep.subr.mxu0 0.0
    %388 = vmatpush1.msra.mxu0 0.0
    %389 = vmatprep.subr.mxu0 0.0
    %390 = vmatpush1.msra.mxu0 0.0
    %391 = vmatprep.subr.mxu0 0.0
    %392 = vmatpush1.msra.mxu0 0.0
    %393 = vmatprep.subr.mxu0 0.0
    %394 = vmatpush1.msra.mxu0 0.0
    %395 = vmatprep.subr.mxu0 0.0
    %396 = vmatpush1.msra.mxu0 0.0
    %397 = vmatprep.subr.mxu0 0.0
    %398 = vmatpush1.msra.mxu0 0.0
    %399 = vmatprep.subr.mxu0 0.0
    %400 = vmatpush1.msra.mxu0 0.0
    %401 = vmatprep.subr.mxu0 0.0
    %402 = vmatpush1.msra.mxu0 0.0
    %403 = vmatprep.subr.mxu0 0.0
    %404 = vmatpush1.msra.mxu0 0.0
    %405 = vmatprep.subr.mxu0 0.0
    %406 = vmatpush1.msra.mxu0 0.0
    %407 = vmatprep.subr.mxu0 0.0
    %408 = vmatpush1.msra.mxu0 0.0
    %409 = vmatprep.mubr.f32.mxu0 0.0
    %410 = vmatmul.mubr.f32.gmra.mrb[0].mxu0 %v292
    %v411 = vpop.f32.mrb[0].mxu0
    %v412 = vadd.f32 %v288, %v411
    %v413 = vpop.f32.mrb[0].mxu0
    %414 = vmatprep.mubr.f32.mxu0 0.0
    %415 = vmatmul.mubr.f32.gmra.mrb[0].mxu0 %v295
    %v416 = vpop.f32.mrb[0].mxu0
    %v417 = vadd.f32 %v288, %v416
    %v418 = vpop.f32.mrb[0].mxu0
    %419 = vmatprep.mubr.f32.mxu0 0.0
    %420 = vmatmul.mubr.f32.gmra.mrb[0].mxu0 %v298
    %v421 = vpop.f32.mrb[0].mxu0
    %v422 = vadd.f32 %v288, %v421
    %v423 = vpop.f32.mrb[0].mxu0
    %424 = vmatprep.mubr.f32.mxu0 0.0
    %425 = vmatmul.mubr.f32.gmra.mrb[0].mxu0 %v301
    %v426 = vpop.f32.mrb[0].mxu0
    %v427 = vadd.f32 %v288, %v426
    %v428 = vpop.f32.mrb[0].mxu0
    %429 = vmatprep.mubr.f32.mxu0 0.0
    %430 = vmatmul.mubr.f32.gmra.mrb[0].mxu0 %v304
    %v431 = vpop.f32.mrb[0].mxu0
    %v432 = vadd.f32 %v288, %v431
    %v433 = vpop.f32.mrb[0].mxu0
    %434 = vmatprep.mubr.f32.mxu0 0.0
    %435 = vmatmul.mubr.f32.gmra.mrb[0].mxu0 %v307
    %v436 = vpop.f32.mrb[0].mxu0
    %v437 = vadd.f32 %v288, %v436
    %v438 = vpop.f32.mrb[0].mxu0
    %439 = vmatprep.mubr.f32.mxu0 0.0
    %440 = vmatmul.mubr.f32.gmra.mrb[0].mxu0 %v310
    %v441 = vpop.f32.mrb[0].mxu0
    %v442 = vadd.f32 %v288, %v441
    %v443 = vpop.f32.mrb[0].mxu0
    %444 = vmatprep.mubr.f32.mxu0 0.0
    %445 = vmatmul.mubr.f32.gmra.mrb[0].mxu0 %v313
    %v446 = vpop.f32.mrb[0].mxu0
    %v447 = vadd.f32 %v288, %v446
    %v448 = vpop.f32.mrb[0].mxu0
    %449 = vmatprep.mubr.f32.mxu0 0.0
    %450 = vmatmul.mubr.f32.gmra.mrb[0].mxu0 %v316
    %v451 = vpop.f32.mrb[0].mxu0
    %v452 = vadd.f32 %v288, %v451
    %v453 = vpop.f32.mrb[0].mxu0
    %454 = vmatprep.mubr.f32.mxu0 0.0
    %455 = vmatmul.mubr.f32.gmra.mrb[0].mxu0 %v319
    %v456 = vpop.f32.mrb[0].mxu0
    %v457 = vadd.f32 %v288, %v456
    %v458 = vpop.f32.mrb[0].mxu0
    %459 = vmatprep.mubr.f32.mxu0 0.0
    %460 = vmatmul.mubr.f32.gmra.mrb[0].mxu0 %v322
    %v461 = vpop.f32.mrb[0].mxu0
    %v462 = vadd.f32 %v288, %v461
    %v463 = vpop.f32.mrb[0].mxu0
    %464 = vmatprep.mubr.f32.mxu0 0.0
    %465 = vmatmul.mubr.f32.gmra.mrb[0].mxu0 %v325
    %v466 = vpop.f32.mrb[0].mxu0
    %v467 = vadd.f32 %v288, %v466
    %v468 = vpop.f32.mrb[0].mxu0
    %469 = vmatprep.mubr.f32.mxu0 0.0
    %470 = vmatmul.mubr.f32.gmra.mrb[0].mxu0 %v328
    %v471 = vpop.f32.mrb[0].mxu0
    %v472 = vadd.f32 %v288, %v471
    %v473 = vpop.f32.mrb[0].mxu0
    %474 = vmatprep.mubr.f32.mxu0 0.0
    %475 = vmatmul.mubr.f32.gmra.mrb[0].mxu0 %v331
    %v476 = vpop.f32.mrb[0].mxu0
    %v477 = vadd.f32 %v288, %v476
    %v478 = vpop.f32.mrb[0].mxu0
    %479 = vmatprep.mubr.f32.mxu0 0.0
    %480 = vmatmul.mubr.f32.gmra.mrb[0].mxu0 %v334
    %v481 = vpop.f32.mrb[0].mxu0
    %v482 = vadd.f32 %v288, %v481
    %v483 = vpop.f32.mrb[0].mxu0
    %484 = vmatprep.mubr.f32.mxu0 0.0
    %485 = vmatmul.mubr.f32.gmra.mrb[0].mxu0 %v337
    %v486 = vpop.f32.mrb[0].mxu0
    %v487 = vadd.f32 %v288, %v486
    %v488 = vpop.f32.mrb[0].mxu0
    %489 = vmatprep.mubr.f32.mxu0 0.0
    %490 = vmatmul.mubr.f32.gmra.mrb[0].mxu0 %v340
    %v491 = vpop.f32.mrb[0].mxu0
    %v492 = vadd.f32 %v288, %v491
    %v493 = vpop.f32.mrb[0].mxu0
    %494 = vmatprep.mubr.f32.mxu0 0.0
    %495 = vmatmul.mubr.f32.gmra.mrb[0].mxu0 %v343
    %v496 = vpop.f32.mrb[0].mxu0
    %v497 = vadd.f32 %v288, %v496
    %v498 = vpop.f32.mrb[0].mxu0
    %499 = vdwg.mxu0
    %v500 = vmul.f32 %v24, %v24
    %v501 = vmul.f32 %v25, %v25
    %v502 = vmul.f32 %v26, %v26
    %v503 = vmul.f32 %v27, %v27
    %v504 = vmul.f32 %v28, %v28
    %v505 = vmul.f32 %v29, %v29
    %v506 = vmul.f32 %v30, %v30
    %v507 = vmul.f32 %v31, %v31
    %v508 = vmul.f32 %v32, %v32
    %v509 = vmul.f32 %v33, %v33
    %v510 = vmul.f32 %v34, %v34
    %v511 = vmul.f32 %v35, %v35
    %v512 = vmul.f32 %v36, %v36
    %v513 = vmul.f32 %v37, %v37
    %v514 = vmul.f32 %v38, %v38
    %v515 = vmul.f32 %v39, %v39
    %v516 = vmul.f32 %v40, %v40
    %v517 = vmul.f32 %v41, %v41
    %v518 = vsel %vm53, %v500, 0.0
    %519 = vadd.xlane.f32.xlu0 %v518
    %v520 = vpop.xlane.xlu0 %519
    %v521 = vsel %vm53, %v501, 0.0
    %522 = vadd.xlane.f32.xlu0 %v521
    %v523 = vpop.xlane.xlu0 %522
    %v524 = vsel %vm53, %v502, 0.0
    %525 = vadd.xlane.f32.xlu0 %v524
    %v526 = vpop.xlane.xlu0 %525
    %v527 = vsel %vm53, %v503, 0.0
    %528 = vadd.xlane.f32.xlu0 %v527
    %v529 = vpop.xlane.xlu0 %528
    %v530 = vsel %vm53, %v504, 0.0
    %531 = vadd.xlane.f32.xlu0 %v530
    %v532 = vpop.xlane.xlu0 %531
    %v533 = vsel %vm53, %v505, 0.0
    %534 = vadd.xlane.f32.xlu0 %v533
    %v535 = vpop.xlane.xlu0 %534
    %v536 = vsel %vm53, %v506, 0.0
    %537 = vadd.xlane.f32.xlu0 %v536
    %v538 = vpop.xlane.xlu0 %537
    %v539 = vsel %vm53, %v507, 0.0
    %540 = vadd.xlane.f32.xlu0 %v539
    %v541 = vpop.xlane.xlu0 %540
    %v542 = vsel %vm53, %v508, 0.0
    %543 = vadd.xlane.f32.xlu0 %v542
    %v544 = vpop.xlane.xlu0 %543
    %v545 = vsel %vm53, %v509, 0.0
    %546 = vadd.xlane.f32.xlu0 %v545
    %v547 = vpop.xlane.xlu0 %546
    %v548 = vsel %vm53, %v510, 0.0
    %549 = vadd.xlane.f32.xlu0 %v548
    %v550 = vpop.xlane.xlu0 %549
    %v551 = vsel %vm53, %v511, 0.0
    %552 = vadd.xlane.f32.xlu0 %v551
    %v553 = vpop.xlane.xlu0 %552
    %v554 = vsel %vm53, %v512, 0.0
    %555 = vadd.xlane.f32.xlu0 %v554
    %v556 = vpop.xlane.xlu0 %555
    %v557 = vsel %vm53, %v513, 0.0
    %558 = vadd.xlane.f32.xlu0 %v557
    %v559 = vpop.xlane.xlu0 %558
    %v560 = vsel %vm53, %v514, 0.0
    %561 = vadd.xlane.f32.xlu0 %v560
    %v562 = vpop.xlane.xlu0 %561
    %v563 = vsel %vm53, %v515, 0.0
    %564 = vadd.xlane.f32.xlu0 %v563
    %v565 = vpop.xlane.xlu0 %564
    %v566 = vsel %vm53, %v516, 0.0
    %567 = vadd.xlane.f32.xlu0 %v566
    %v568 = vpop.xlane.xlu0 %567
    %v569 = vsel %vm53, %v517, 0.0
    %570 = vadd.xlane.f32.xlu0 %v569
    %v571 = vpop.xlane.xlu0 %570
    %v572 = vadd.f32 %v520, 1e-12
    %v573 = vadd.f32 %v523, 1e-12
    %v574 = vadd.f32 %v526, 1e-12
    %v575 = vadd.f32 %v529, 1e-12
    %v576 = vadd.f32 %v532, 1e-12
    %v577 = vadd.f32 %v535, 1e-12
    %v578 = vadd.f32 %v538, 1e-12
    %v579 = vadd.f32 %v541, 1e-12
    %v580 = vadd.f32 %v544, 1e-12
    %v581 = vadd.f32 %v547, 1e-12
    %v582 = vadd.f32 %v550, 1e-12
    %v583 = vadd.f32 %v553, 1e-12
    %v584 = vadd.f32 %v556, 1e-12
    %v585 = vadd.f32 %v559, 1e-12
    %v586 = vadd.f32 %v562, 1e-12
    %v587 = vadd.f32 %v565, 1e-12
    %v588 = vadd.f32 %v568, 1e-12
    %v589 = vadd.f32 %v571, 1e-12
    %v590 = vrsqrt.pop %v572
    %v591 = vrsqrt.pop %v573
    %v592 = vrsqrt.pop %v574
    %v593 = vrsqrt.pop %v575
    %v594 = vrsqrt.pop %v576
    %v595 = vrsqrt.pop %v577
    %v596 = vrsqrt.pop %v578
    %v597 = vrsqrt.pop %v579
    %v598 = vrsqrt.pop %v580
    %v599 = vrsqrt.pop %v581
    %v600 = vrsqrt.pop %v582
    %v601 = vrsqrt.pop %v583
    %v602 = vrsqrt.pop %v584
    %v603 = vrsqrt.pop %v585
    %v604 = vrsqrt.pop %v586
    %v605 = vrsqrt.pop %v587
    %v606 = vrsqrt.pop %v588
    %v607 = vrsqrt.pop %v589
    %v608 = vmul.f32 %v175, %v590
    %v609 = vmul.f32 %v180, %v591
    %v610 = vmul.f32 %v185, %v592
    %v611 = vmul.f32 %v190, %v593
    %v612 = vmul.f32 %v195, %v594
    %v613 = vmul.f32 %v200, %v595
    %v614 = vmul.f32 %v205, %v596
    %v615 = vmul.f32 %v210, %v597
    %v616 = vmul.f32 %v215, %v598
    %v617 = vmul.f32 %v220, %v599
    %v618 = vmul.f32 %v225, %v600
    %v619 = vmul.f32 %v230, %v601
    %v620 = vmul.f32 %v235, %v602
    %v621 = vmul.f32 %v240, %v603
    %v622 = vmul.f32 %v245, %v604
    %v623 = vmul.f32 %v250, %v605
    %v624 = vmul.f32 %v255, %v606
    %v625 = vmul.f32 %v260, %v607
    %vm626 = vcmask 171136
    %v627 = vsel %vm626, %v608, -inf
    %628 = vmax.xlane.f32.xlu0 %v627
    %v629 = vpop.xlane.xlu0 %628
    %v630 = vsel %vm626, %v609, -inf
    %631 = vmax.xlane.f32.xlu0 %v630
    %v632 = vpop.xlane.xlu0 %631
    %v633 = vsel %vm626, %v610, -inf
    %634 = vmax.xlane.f32.xlu0 %v633
    %v635 = vpop.xlane.xlu0 %634
    %v636 = vsel %vm626, %v611, -inf
    %637 = vmax.xlane.f32.xlu0 %v636
    %v638 = vpop.xlane.xlu0 %637
    %v639 = vsel %vm626, %v612, -inf
    %640 = vmax.xlane.f32.xlu0 %v639
    %v641 = vpop.xlane.xlu0 %640
    %v642 = vsel %vm626, %v613, -inf
    %643 = vmax.xlane.f32.xlu0 %v642
    %v644 = vpop.xlane.xlu0 %643
    %v645 = vsel %vm626, %v614, -inf
    %646 = vmax.xlane.f32.xlu0 %v645
    %v647 = vpop.xlane.xlu0 %646
    %v648 = vsel %vm626, %v615, -inf
    %649 = vmax.xlane.f32.xlu0 %v648
    %v650 = vpop.xlane.xlu0 %649
    %v651 = vsel %vm626, %v616, -inf
    %652 = vmax.xlane.f32.xlu0 %v651
    %v653 = vpop.xlane.xlu0 %652
    %v654 = vsel %vm626, %v617, -inf
    %655 = vmax.xlane.f32.xlu0 %v654
    %v656 = vpop.xlane.xlu0 %655
    %v657 = vsel %vm626, %v618, -inf
    %658 = vmax.xlane.f32.xlu0 %v657
    %v659 = vpop.xlane.xlu0 %658
    %v660 = vsel %vm626, %v619, -inf
    %661 = vmax.xlane.f32.xlu0 %v660
    %v662 = vpop.xlane.xlu0 %661
    %v663 = vsel %vm626, %v620, -inf
    %664 = vmax.xlane.f32.xlu0 %v663
    %v665 = vpop.xlane.xlu0 %664
    %v666 = vsel %vm626, %v621, -inf
    %667 = vmax.xlane.f32.xlu0 %v666
    %v668 = vpop.xlane.xlu0 %667
    %v669 = vsel %vm626, %v622, -inf
    %670 = vmax.xlane.f32.xlu0 %v669
    %v671 = vpop.xlane.xlu0 %670
    %v672 = vsel %vm626, %v623, -inf
    %673 = vmax.xlane.f32.xlu0 %v672
    %v674 = vpop.xlane.xlu0 %673
    %v675 = vsel %vm626, %v624, -inf
    %676 = vmax.xlane.f32.xlu0 %v675
    %v677 = vpop.xlane.xlu0 %676
    %v678 = vsel %vm626, %v625, -inf
    %679 = vmax.xlane.f32.xlu0 %v678
    %v680 = vpop.xlane.xlu0 %679
    %v681 = vmul.f32 %v629, 2.0
    %v682 = vmul.f32 %v632, 2.0
    %v683 = vmul.f32 %v635, 2.0
    %v684 = vmul.f32 %v638, 2.0
    %v685 = vmul.f32 %v641, 2.0
    %v686 = vmul.f32 %v644, 2.0
    %v687 = vmul.f32 %v647, 2.0
    %v688 = vmul.f32 %v650, 2.0
    %v689 = vmul.f32 %v653, 2.0
    %v690 = vmul.f32 %v656, 2.0
    %v691 = vmul.f32 %v659, 2.0
    %v692 = vmul.f32 %v662, 2.0
    %v693 = vmul.f32 %v665, 2.0
    %v694 = vmul.f32 %v668, 2.0
    %v695 = vmul.f32 %v671, 2.0
    %v696 = vmul.f32 %v674, 2.0
    %v697 = vmul.f32 %v677, 2.0
    %v698 = vmul.f32 %v680, 2.0
    %v699 = vxor.u32 %v681, 2147483648
    %v700 = vxor.u32 %v682, 2147483648
    %v701 = vxor.u32 %v683, 2147483648
    %v702 = vxor.u32 %v684, 2147483648
    %v703 = vxor.u32 %v685, 2147483648
    %v704 = vxor.u32 %v686, 2147483648
    %v705 = vxor.u32 %v687, 2147483648
    %v706 = vxor.u32 %v688, 2147483648
    %v707 = vxor.u32 %v689, 2147483648
    %v708 = vxor.u32 %v690, 2147483648
    %v709 = vxor.u32 %v691, 2147483648
    %v710 = vxor.u32 %v692, 2147483648
    %v711 = vxor.u32 %v693, 2147483648
    %v712 = vxor.u32 %v694, 2147483648
    %v713 = vxor.u32 %v695, 2147483648
    %v714 = vxor.u32 %v696, 2147483648
    %v715 = vxor.u32 %v697, 2147483648
    %v716 = vxor.u32 %v698, 2147483648
    %v717 = vmul.f32 %v699, 1.442695
    %v718 = vpow.pop %v717
    %v719 = vmul.f32 %v700, 1.442695
    %v720 = vpow.pop %v719
    %v721 = vmul.f32 %v701, 1.442695
    %v722 = vpow.pop %v721
    %v723 = vmul.f32 %v702, 1.442695
    %v724 = vpow.pop %v723
    %v725 = vmul.f32 %v703, 1.442695
    %v726 = vpow.pop %v725
    %v727 = vmul.f32 %v704, 1.442695
    %v728 = vpow.pop %v727
    %v729 = vmul.f32 %v705, 1.442695
    %v730 = vpow.pop %v729
    %v731 = vmul.f32 %v706, 1.442695
    %v732 = vpow.pop %v731
    %v733 = vmul.f32 %v707, 1.442695
    %v734 = vpow.pop %v733
    %v735 = vmul.f32 %v708, 1.442695
    %v736 = vpow.pop %v735
    %v737 = vmul.f32 %v709, 1.442695
    %v738 = vpow.pop %v737
    %v739 = vmul.f32 %v710, 1.442695
    %v740 = vpow.pop %v739
    %v741 = vmul.f32 %v711, 1.442695
    %v742 = vpow.pop %v741
    %v743 = vmul.f32 %v712, 1.442695
    %v744 = vpow.pop %v743
    %v745 = vmul.f32 %v713, 1.442695
    %v746 = vpow.pop %v745
    %v747 = vmul.f32 %v714, 1.442695
    %v748 = vpow.pop %v747
    %v749 = vmul.f32 %v715, 1.442695
    %v750 = vpow.pop %v749
    %v751 = vmul.f32 %v716, 1.442695
    %v752 = vpow.pop %v751
    %v753 = vadd.f32 %v718, 1.0
    %v754 = vadd.f32 %v720, 1.0
    %v755 = vadd.f32 %v722, 1.0
    %v756 = vadd.f32 %v724, 1.0
    %v757 = vadd.f32 %v726, 1.0
    %v758 = vadd.f32 %v728, 1.0
    %v759 = vadd.f32 %v730, 1.0
    %v760 = vadd.f32 %v732, 1.0
    %v761 = vadd.f32 %v734, 1.0
    %v762 = vadd.f32 %v736, 1.0
    %v763 = vadd.f32 %v738, 1.0
    %v764 = vadd.f32 %v740, 1.0
    %v765 = vadd.f32 %v742, 1.0
    %v766 = vadd.f32 %v744, 1.0
    %v767 = vadd.f32 %v746, 1.0
    %v768 = vadd.f32 %v748, 1.0
    %v769 = vadd.f32 %v750, 1.0
    %v770 = vadd.f32 %v752, 1.0
    %v771 = vrcp.pop %v753
    %v772 = vmul.f32 1.0, %v771
    %v773 = vrcp.pop %v754
    %v774 = vmul.f32 1.0, %v773
    %v775 = vrcp.pop %v755
    %v776 = vmul.f32 1.0, %v775
    %v777 = vrcp.pop %v756
    %v778 = vmul.f32 1.0, %v777
    %v779 = vrcp.pop %v757
    %v780 = vmul.f32 1.0, %v779
    %v781 = vrcp.pop %v758
    %v782 = vmul.f32 1.0, %v781
    %v783 = vrcp.pop %v759
    %v784 = vmul.f32 1.0, %v783
    %v785 = vrcp.pop %v760
    %v786 = vmul.f32 1.0, %v785
    %v787 = vrcp.pop %v761
    %v788 = vmul.f32 1.0, %v787
    %v789 = vrcp.pop %v762
    %v790 = vmul.f32 1.0, %v789
    %v791 = vrcp.pop %v763
    %v792 = vmul.f32 1.0, %v791
    %v793 = vrcp.pop %v764
    %v794 = vmul.f32 1.0, %v793
    %v795 = vrcp.pop %v765
    %v796 = vmul.f32 1.0, %v795
    %v797 = vrcp.pop %v766
    %v798 = vmul.f32 1.0, %v797
    %v799 = vrcp.pop %v767
    %v800 = vmul.f32 1.0, %v799
    %v801 = vrcp.pop %v768
    %v802 = vmul.f32 1.0, %v801
    %v803 = vrcp.pop %v769
    %v804 = vmul.f32 1.0, %v803
    %v805 = vrcp.pop %v770
    %v806 = vmul.f32 1.0, %v805
    %v807 = vmul.f32 %v772, 0.5
    %v808 = vmul.f32 %v774, 0.5
    %v809 = vmul.f32 %v776, 0.5
    %v810 = vmul.f32 %v778, 0.5
    %v811 = vmul.f32 %v780, 0.5
    %v812 = vmul.f32 %v782, 0.5
    %v813 = vmul.f32 %v784, 0.5
    %v814 = vmul.f32 %v786, 0.5
    %v815 = vmul.f32 %v788, 0.5
    %v816 = vmul.f32 %v790, 0.5
    %v817 = vmul.f32 %v792, 0.5
    %v818 = vmul.f32 %v794, 0.5
    %v819 = vmul.f32 %v796, 0.5
    %v820 = vmul.f32 %v798, 0.5
    %v821 = vmul.f32 %v800, 0.5
    %v822 = vmul.f32 %v802, 0.5
    %v823 = vmul.f32 %v804, 0.5
    %v824 = vmul.f32 %v806, 0.5
    %v825 = vmul.f32 %v412, %v807
    %v826 = vmul.f32 %v417, %v808
    %v827 = vmul.f32 %v422, %v809
    %v828 = vmul.f32 %v427, %v810
    %v829 = vmul.f32 %v432, %v811
    %v830 = vmul.f32 %v437, %v812
    %v831 = vmul.f32 %v442, %v813
    %v832 = vmul.f32 %v447, %v814
    %v833 = vmul.f32 %v452, %v815
    %v834 = vmul.f32 %v457, %v816
    %v835 = vmul.f32 %v462, %v817
    %v836 = vmul.f32 %v467, %v818
    %v837 = vmul.f32 %v472, %v819
    %v838 = vmul.f32 %v477, %v820
    %v839 = vmul.f32 %v482, %v821
    %v840 = vmul.f32 %v487, %v822
    %v841 = vmul.f32 %v492, %v823
    %v842 = vmul.f32 %v497, %v824
    %843 = vst [vmem:[#allocation2] sm:$0xff] %v825
    %844 = vst [vmem:[#allocation2 + $0x8] sm:$0xff] %v826
    %845 = vst [vmem:[#allocation2 + $0x10] sm:$0xff] %v827
    %846 = vst [vmem:[#allocation2 + $0x18] sm:$0xff] %v828
    %847 = vst [vmem:[#allocation2 + $0x20] sm:$0xff] %v829
    %848 = vst [vmem:[#allocation2 + $0x28] sm:$0xff] %v830
    %849 = vst [vmem:[#allocation2 + $0x30] sm:$0xff] %v831
    %850 = vst [vmem:[#allocation2 + $0x38] sm:$0xff] %v832
    %851 = vst [vmem:[#allocation2 + $0x40] sm:$0xff] %v833
    %852 = vst [vmem:[#allocation2 + $0x48] sm:$0xff] %v834
    %853 = vst [vmem:[#allocation2 + $0x50] sm:$0xff] %v835
    %854 = vst [vmem:[#allocation2 + $0x58] sm:$0xff] %v836
    %855 = vst [vmem:[#allocation2 + $0x60] sm:$0xff] %v837
    %856 = vst [vmem:[#allocation2 + $0x68] sm:$0xff] %v838
    %857 = vst [vmem:[#allocation2 + $0x70] sm:$0xff] %v839
    %858 = vst [vmem:[#allocation2 + $0x78] sm:$0xff] %v840
    %859 = vst [vmem:[#allocation2 + $0x80] sm:$0xff] %v841
    %860 = vst [vmem:[#allocation2 + $0x88] sm:$0xff] %v842
    %v861 = vand.u32 2147483647, %v24
    %v862 = vand.u32 2147483647, %v25
    %v863 = vand.u32 2147483647, %v26
    %v864 = vand.u32 2147483647, %v27
    %v865 = vand.u32 2147483647, %v28
    %v866 = vand.u32 2147483647, %v29
    %v867 = vand.u32 2147483647, %v30
    %v868 = vand.u32 2147483647, %v31
    %v869 = vand.u32 2147483647, %v32
    %v870 = vand.u32 2147483647, %v33
    %v871 = vand.u32 2147483647, %v34
    %v872 = vand.u32 2147483647, %v35
    %v873 = vand.u32 2147483647, %v36
    %v874 = vand.u32 2147483647, %v37
    %v875 = vand.u32 2147483647, %v38
    %v876 = vand.u32 2147483647, %v39
    %v877 = vand.u32 2147483647, %v40
    %v878 = vand.u32 2147483647, %v41
    %v879 = vsel %vm53, %v861, 0.0
    %v880 = vsel %vm53, %v862, 0.0
    %v881 = vadd.f32 %v879, %v880
    %v882 = vsel %vm53, %v863, 0.0
    %v883 = vadd.f32 %v881, %v882
    %v884 = vsel %vm53, %v864, 0.0
    %v885 = vadd.f32 %v883, %v884
    %v886 = vsel %vm53, %v865, 0.0
    %v887 = vadd.f32 %v885, %v886
    %v888 = vsel %vm53, %v866, 0.0
    %v889 = vadd.f32 %v887, %v888
    %v890 = vsel %vm53, %v867, 0.0
    %v891 = vadd.f32 %v889, %v890
    %v892 = vsel %vm53, %v868, 0.0
    %v893 = vadd.f32 %v891, %v892
    %v894 = vsel %vm53, %v869, 0.0
    %v895 = vadd.f32 %v893, %v894
    %v896 = vsel %vm53, %v870, 0.0
    %v897 = vadd.f32 %v895, %v896
    %v898 = vsel %vm53, %v871, 0.0
    %v899 = vadd.f32 %v897, %v898
    %v900 = vsel %vm53, %v872, 0.0
    %v901 = vadd.f32 %v899, %v900
    %v902 = vsel %vm53, %v873, 0.0
    %v903 = vadd.f32 %v901, %v902
    %v904 = vsel %vm53, %v874, 0.0
    %v905 = vadd.f32 %v903, %v904
    %v906 = vsel %vm53, %v875, 0.0
    %v907 = vadd.f32 %v905, %v906
    %v908 = vsel %vm53, %v876, 0.0
    %v909 = vadd.f32 %v907, %v908
    %v910 = vsel %vm53, %v877, 0.0
    %v911 = vadd.f32 %v909, %v910
    %v912 = vsel %vm53, %v878, 0.0
    %v913 = vadd.f32 %v911, %v912
    %v914 = vrot.slane %v913, 4
    %v915 = vadd.f32 %v913, %v914
    %v916 = vrot.slane %v915, 2
    %v917 = vadd.f32 %v915, %v916
    %v918 = vrot.slane %v917, 1
    %v919 = vadd.f32 %v917, %v918
    %vm920 = vcmask 253952
    %921 = vst.msk [vmem:[#allocation4] sm:$0x1] %vm920, %v919
    // Predicated region
    $region22: #{tpu_custom_call.1} parent=1 // pred_check
      _
    $region23: #{tpu_custom_call.1} parent=1 // pred_check_branch
      %923 = sbr.rel (0) target = $region25
    $region24: #{tpu_custom_call.1} parent=1 // pred_region
      %s925 = ssub.s32 2304, 2304
      %926 = vsyncadd [#allocation3], %s925
      %s927 = sshll.u32 [#allocation2], 4
      %s928 = int_to_ptr.vmem [resolvable:$true] %s927
      %933 = dma.vmem_to_hbm [thread:$0]  %s928, 2304, %s5, [#allocation3], 128, 128, 8
    $region25: #{tpu_custom_call.1} parent=1 // pred_fallthru
      _
    // Predicated region
    $region26: #{tpu_custom_call.1} parent=1 // pred_check
      _
    $region27: #{tpu_custom_call.1} parent=1 // pred_check_branch
      %935 = sbr.rel (0) target = $region29
    $region28: #{tpu_custom_call.1} parent=1 // pred_region
      %s937 = ssub.s32 16, 16
      %938 = vsyncadd [#allocation5], %s937
      %s940 = sshll.u32 [#allocation4], 4
      %s941 = int_to_ptr.vmem [resolvable:$true] %s940
      %943 = dma.vmem_to_hbm [thread:$0]  %s941, 16, %s6, [#allocation5]
    $region29: #{tpu_custom_call.1} parent=1 // pred_fallthru
      _
    // Predicated region
    $region30: #{tpu_custom_call.1} parent=1 // pred_check
      _
    $region31: #{tpu_custom_call.1} parent=1 // pred_check_branch
      %945 = sbr.rel (0) target = $region33
    $region32: #{tpu_custom_call.1} parent=1 // pred_region
      %946 = dma.done [#allocation3], 2304
    $region33: #{tpu_custom_call.1} parent=1 // pred_fallthru
      _
    // Predicated region
    $region34: #{tpu_custom_call.1} parent=1 // pred_check
      _
    $region35: #{tpu_custom_call.1} parent=1 // pred_check_branch
      %948 = sbr.rel (0) target = $region37
    $region36: #{tpu_custom_call.1} parent=1 // pred_region
      %949 = dma.done [#allocation5], 16
    $region37: #{tpu_custom_call.1} parent=1 // pred_fallthru
      _
    %950 = vsyncpa [#allocation3], 1
    %951 = vsyncpa [#allocation5], 1

</llo_original>
